<compile_context>
chip_gen: v7x
topology: tpu7x:2x2x1
jax: 0.10.0
libtpu: 0.0.40
codegen_flags: <defaults>
</compile_context>

<pallas_src>
import functools

import jax
import jax.numpy as jnp
from jax import lax
from jax.experimental import pallas as pl
from jax.experimental.pallas import tpu as pltpu

EPS = 1e-5  # nn.BatchNorm2d default


# --------------------------------------------------------------------------
# Tiling / budget helpers
# --------------------------------------------------------------------------
def _vmem_budget_bytes():
    """~75% of physical VMEM (chip-aware: 128 MiB v5e/v6e, 64 MiB v7x)."""
    try:
        cap = int(pltpu.get_tpu_info().vmem_capacity_bytes)
    except Exception:
        cap = 64 * 1024 * 1024  # conservative default (v7x per-core VMEM)
    return (cap * 3) // 4


def _sublane_align(dtype):
    """Native sublane packing: 8 for 32-bit, 16 for 16-bit, 32 for 8-bit."""
    return max(8, 32 // jnp.dtype(dtype).itemsize)


def _aligned_divisor_tiles(dim, align):
    """Legal (non-last-dim) block sizes: aligned divisors of dim, plus dim itself
    (a full-extent block is always legal)."""
    tiles = {dim}
    t = align
    while t <= dim:
        if dim % t == 0:
            tiles.add(t)
        t += align
    return sorted(tiles)


def _choose_c_tile(tiles, max_tile, prefer_two_blocks, dim):
    """Largest legal tile <= max_tile; prefer >=2 blocks (megacore) when possible."""
    fits = [t for t in tiles if t <= max_tile]
    if not fits:
        return None
    if prefer_two_blocks:
        two = [t for t in fits if dim // t >= 2]
        if two:
            return max(two)
    return max(fits)


def _pick_tile(dim, align, max_tile):
    """Largest multiple of `align` that evenly divides `dim` and is <= max_tile.
    Falls back to the full dim (always a legal block size)."""
    if dim <= max_tile:
        return dim
    t = (max_tile // align) * align
    while t >= align:
        if dim % t == 0:
            return t
        t -= align
    return dim


# --------------------------------------------------------------------------
# Fused single-pass kernel: stats + normalize from one resident VMEM slab
# --------------------------------------------------------------------------
def _fused_kernel(x_ref, gamma_ref, beta_ref, o_ref, *, inv_count):
    # x_ref / o_ref: [N, c_tile, HW]; gamma/beta: [c_tile, 1]
    x = x_ref[...].astype(jnp.float32)

    # Lane (XLU) reduce over HW first, then fold the batch axis.
    s = jnp.sum(x, axis=2, keepdims=True)          # [N, c_tile, 1]
    ss = jnp.sum(x * x, axis=2, keepdims=True)     # [N, c_tile, 1]
    s = jnp.sum(s, axis=0, keepdims=True)          # [1, c_tile, 1]
    ss = jnp.sum(ss, axis=0, keepdims=True)        # [1, c_tile, 1]

    mean = s * inv_count
    # f32 accumulation; clamp variance at 0 to guard E[x^2]-E[x]^2 cancellation.
    var = jnp.maximum(ss * inv_count - mean * mean, 0.0)
    inv_std = lax.rsqrt(var + EPS)

    scale = gamma_ref[...].astype(jnp.float32)[None] * inv_std          # [1,c_tile,1]
    shift = beta_ref[...].astype(jnp.float32)[None] - mean * scale      # [1,c_tile,1]

    o_ref[...] = (x * scale + shift).astype(o_ref.dtype)


# --------------------------------------------------------------------------
# Two-pass fallback kernels
# --------------------------------------------------------------------------
def _stats_kernel(x_ref, gamma_ref, beta_ref, scale_ref, shift_ref,
                  sum_acc, sq_acc, *, inv_count):
    # x_ref: [1, c_tile, hw_tile]; gamma/beta: [c_tile, 1]
    # scale/shift outputs: [c_tile, 1]; scratch accumulators: [c_tile, 1] f32
    n = pl.program_id(1)
    hw = pl.program_id(2)

    @pl.when(jnp.logical_and(n == 0, hw == 0))
    def _():
        sum_acc[...] = jnp.zeros_like(sum_acc)
        sq_acc[...] = jnp.zeros_like(sq_acc)

    x = x_ref[0].astype(jnp.float32)                      # [c_tile, hw_tile]
    sum_acc[...] += jnp.sum(x, axis=-1, keepdims=True)
    sq_acc[...] += jnp.sum(x * x, axis=-1, keepdims=True)

    @pl.when(jnp.logical_and(n == pl.num_programs(1) - 1,
                             hw == pl.num_programs(2) - 1))
    def _():
        mean = sum_acc[...] * inv_count
        var = jnp.maximum(sq_acc[...] * inv_count - mean * mean, 0.0)
        inv_std = lax.rsqrt(var + EPS)
        scale = gamma_ref[...].astype(jnp.float32) * inv_std
        shift = beta_ref[...].astype(jnp.float32) - mean * scale
        scale_ref[...] = scale
        shift_ref[...] = shift


def _norm_kernel(x_ref, scale_ref, shift_ref, o_ref):
    # Streaming pass: one load, one FMA, one store per element.
    x = x_ref[...].astype(jnp.float32)                    # [1, c_tile, hw_tile]
    scale = scale_ref[...][None]                          # [1, c_tile, 1]
    shift = shift_ref[...][None]
    o_ref[...] = (x * scale + shift).astype(o_ref.dtype)


# --------------------------------------------------------------------------
# Wrapper
# --------------------------------------------------------------------------
def conditional_batchnorm2d(x, domain_features, gamma, beta,
                            c_tile=None, hw_tile=None, force_two_pass=False):
    """x: [N, C, H, W]; domain_features: [N, D] (ignored, as in reference);
    gamma/beta: [C]. Returns [N, C, H, W].

    Explicit c_tile / hw_tile (or force_two_pass=True) select the two-pass
    streaming path; otherwise the fused single-read path is used whenever a
    per-channel-tile slab fits the chip's VMEM budget."""
    del domain_features  # reference forward ignores it (cond_strength unused)
    N, C, H, W = x.shape
    HW = H * W
    x3 = x.reshape(N, C, HW)  # free reshape; H*W stays the contiguous lane axis
    itemsize = jnp.dtype(x.dtype).itemsize
    align = _sublane_align(x.dtype)
    budget = _vmem_budget_bytes()

    g2 = gamma.reshape(C, 1).astype(jnp.float32)
    b2 = beta.reshape(C, 1).astype(jnp.float32)
    inv_count = 1.0 / float(N * HW)

    c_tiles = _aligned_divisor_tiles(C, align)
    prefer_two = C >= 2 * align  # keep both v7x TensorCores busy when possible

    # ---- Fused single-pass path: 1 read + 1 write of x -------------------
    if not force_two_pass and c_tile is None and hw_tile is None:
        # VMEM footprint per slab element: 2x(in)+2x(out) double-buffered blocks
        # in the input dtype, plus ~3 f32 compute temporaries (conservative).
        bytes_per_elem = 4 * itemsize + 12
        max_c_fused = budget // max(1, bytes_per_elem * N * HW)
        ct = _choose_c_tile(c_tiles, max_c_fused, prefer_two, C)
        if ct is not None:
            out3 = pl.pallas_call(
                functools.partial(_fused_kernel, inv_count=inv_count),
                out_shape=jax.ShapeDtypeStruct((N, C, HW), x.dtype),
                grid=(C // ct,),
                in_specs=[
                    pl.BlockSpec((N, ct, HW), lambda c: (0, c, 0)),
                    pl.BlockSpec((ct, 1), lambda c: (c, 0)),
                    pl.BlockSpec((ct, 1), lambda c: (c, 0)),
                ],
                out_specs=pl.BlockSpec((N, ct, HW), lambda c: (0, c, 0)),
                compiler_params=pltpu.CompilerParams(
                    dimension_semantics=("parallel",),
                    vmem_limit_bytes=budget),
            )(x3, g2, b2)
            return out3.reshape(N, C, H, W)

    # ---- Two-pass fallback: stats pass + streaming normalize pass --------
    if c_tile is None:
        c_tile = _choose_c_tile(c_tiles, 256, prefer_two, C) or C
    if hw_tile is None:
        # Target ~4 MiB x-blocks (>=1 MiB is near HBM roofline; per-step
        # pipeline overhead ~0.35us becomes negligible).
        target_block_bytes = 4 * 1024 * 1024
        hw_cap = max(128, (target_block_bytes // max(1, c_tile * itemsize))
                     // 128 * 128)
        hw_tile = _pick_tile(HW, 128, hw_cap)
    assert C % c_tile == 0 and HW % hw_tile == 0

    grid = (C // c_tile, N, HW // hw_tile)

    # Pass 1: per-channel batch stats -> fused scale/shift
    scale, shift = pl.pallas_call(
        functools.partial(_stats_kernel, inv_count=inv_count),
        out_shape=(jax.ShapeDtypeStruct((C, 1), jnp.float32),
                   jax.ShapeDtypeStruct((C, 1), jnp.float32)),
        grid=grid,
        in_specs=[
            pl.BlockSpec((1, c_tile, hw_tile), lambda c, n, hw: (n, c, hw)),
            pl.BlockSpec((c_tile, 1), lambda c, n, hw: (c, 0)),
            pl.BlockSpec((c_tile, 1), lambda c, n, hw: (c, 0)),
        ],
        out_specs=(
            pl.BlockSpec((c_tile, 1), lambda c, n, hw: (c, 0)),
            pl.BlockSpec((c_tile, 1), lambda c, n, hw: (c, 0)),
        ),
        scratch_shapes=[pltpu.VMEM((c_tile, 1), jnp.float32),
                        pltpu.VMEM((c_tile, 1), jnp.float32)],
        compiler_params=pltpu.CompilerParams(
            dimension_semantics=("parallel", "arbitrary", "arbitrary"),
            vmem_limit_bytes=budget),
    )(x3, g2, b2)

    # Pass 2: y = x * scale + shift (streaming, lane-dense output)
    out3 = pl.pallas_call(
        _norm_kernel,
        out_shape=jax.ShapeDtypeStruct((N, C, HW), x.dtype),
        grid=grid,
        in_specs=[
            pl.BlockSpec((1, c_tile, hw_tile), lambda c, n, hw: (n, c, hw)),
            pl.BlockSpec((c_tile, 1), lambda c, n, hw: (c, 0)),
            pl.BlockSpec((c_tile, 1), lambda c, n, hw: (c, 0)),
        ],
        out_specs=pl.BlockSpec((1, c_tile, hw_tile), lambda c, n, hw: (n, c, hw)),
        compiler_params=pltpu.CompilerParams(
            dimension_semantics=("parallel", "parallel", "parallel"),
            vmem_limit_bytes=budget),
    )(x3, scale, shift)

    return out3.reshape(N, C, H, W)


# --------------------------------------------------------------------------
# Reference + self-test
# --------------------------------------------------------------------------
def _reference(x, gamma, beta):
    # Pure-JAX training-mode BatchNorm2d reference for verification.
    mean = jnp.mean(x, axis=(0, 2, 3), keepdims=True)
    var = jnp.mean((x - mean) ** 2, axis=(0, 2, 3), keepdims=True)
    xhat = (x - mean) / jnp.sqrt(var + EPS)
    return gamma.reshape(1, -1, 1, 1) * xhat + beta.reshape(1, -1, 1, 1)


if __name__ == "__main__":
    key = jax.random.PRNGKey(0)
    kx, kd, kg, kb = jax.random.split(key, 4)

    N, C, H, W = 2, 4, 16, 16
    domain_feature_dim = 8

    x = jax.random.normal(kx, (N, C, H, W), dtype=jnp.float32)
    domain_features = jax.random.normal(kd, (N, domain_feature_dim),
                                        dtype=jnp.float32)

    # Deterministic affine parameters (exercise the affine path).
    gamma = 1.0 + 0.1 * jax.random.normal(kg, (C,), dtype=jnp.float32)
    beta = 0.1 * jax.random.normal(kb, (C,), dtype=jnp.float32)

    ref = _reference(x, gamma, beta)

    # Default: fused single-pass path (slab fits VMEM at this shape).
    out = conditional_batchnorm2d(x, domain_features, gamma, beta)
    out = jax.block_until_ready(out)
    assert out.shape == (N, C, H, W)
    assert jnp.allclose(out, ref, atol=1e-4, rtol=1e-4)

    # Forced two-pass fallback with a small HW tile: exercises the tiled
    # multi-step reduction + streaming-normalize path.
    out_tp = conditional_batchnorm2d(x, domain_features, gamma, beta,
                                     hw_tile=128, force_two_pass=True)
    out_tp = jax.block_until_ready(out_tp)
    assert jnp.allclose(out_tp, ref, atol=1e-4, rtol=1e-4)

    print("KERNEL_OK")
</pallas_src>

<mosaic_0001>
module attributes {stable_mosaic.version = 11 : i64} {
  func.func @_fused_kernel(%arg0: i32, %arg1: memref<2x4x256xf32, #tpu.memory_space<vmem>>, %arg2: memref<4x1xf32, #tpu.memory_space<vmem>>, %arg3: memref<4x1xf32, #tpu.memory_space<vmem>>, %arg4: memref<2x4x256xf32, #tpu.memory_space<vmem>>) attributes {dimension_semantics = [#tpu.dimension_semantics<parallel>], iteration_bounds = array<i64: 1>, scalar_prefetch = 0 : i64, scratch_operands = 0 : i64, tpu.core_type = #tpu.core_type<tc>, window_params = [{transform_indices = @transform_0, window_bounds = array<i64: 2, 4, 256>}, {transform_indices = @transform_1, window_bounds = array<i64: 4, 1>}, {transform_indices = @transform_2, window_bounds = array<i64: 4, 1>}, {transform_indices = @transform_3, window_bounds = array<i64: 2, 4, 256>}]} {
    %c0 = arith.constant 0 : index
    %c0_0 = arith.constant 0 : index
    %c0_1 = arith.constant 0 : index
    %0 = vector.load %arg1[%c0, %c0_0, %c0_1] : memref<2x4x256xf32, #tpu.memory_space<vmem>>, vector<2x4x256xf32>
    %cst = arith.constant dense<0.000000e+00> : vector<2x4xf32>
    %1 = vector.multi_reduction <add>, %0, %cst [2] : vector<2x4x256xf32> to vector<2x4xf32>
    %2 = vector.shape_cast %1 : vector<2x4xf32> to vector<2x4x1xf32>
    %3 = arith.mulf %0, %0 : vector<2x4x256xf32>
    %cst_2 = arith.constant dense<0.000000e+00> : vector<2x4xf32>
    %4 = vector.multi_reduction <add>, %3, %cst_2 [2] : vector<2x4x256xf32> to vector<2x4xf32>
    %5 = vector.shape_cast %4 : vector<2x4xf32> to vector<2x4x1xf32>
    %cst_3 = arith.constant dense<0.000000e+00> : vector<4x1xf32>
    %6 = vector.multi_reduction <add>, %2, %cst_3 [0] : vector<2x4x1xf32> to vector<4x1xf32>
    %7 = vector.shape_cast %6 : vector<4x1xf32> to vector<1x4x1xf32>
    %cst_4 = arith.constant dense<0.000000e+00> : vector<4x1xf32>
    %8 = vector.multi_reduction <add>, %5, %cst_4 [0] : vector<2x4x1xf32> to vector<4x1xf32>
    %9 = vector.shape_cast %8 : vector<4x1xf32> to vector<1x4x1xf32>
    %cst_5 = arith.constant 0.001953125 : f32
    %10 = vector.broadcast %cst_5 : f32 to vector<1x4x1xf32>
    %11 = arith.mulf %7, %10 : vector<1x4x1xf32>
    %cst_6 = arith.constant 0.001953125 : f32
    %12 = vector.broadcast %cst_6 : f32 to vector<1x4x1xf32>
    %13 = arith.mulf %9, %12 : vector<1x4x1xf32>
    %14 = arith.mulf %11, %11 : vector<1x4x1xf32>
    %15 = arith.subf %13, %14 : vector<1x4x1xf32>
    %cst_7 = arith.constant 0.000000e+00 : f32
    %16 = vector.broadcast %cst_7 : f32 to vector<1x4x1xf32>
    %17 = arith.maximumf %15, %16 : vector<1x4x1xf32>
    %cst_8 = arith.constant 9.99999974E-6 : f32
    %18 = vector.broadcast %cst_8 : f32 to vector<1x4x1xf32>
    %19 = arith.addf %17, %18 : vector<1x4x1xf32>
    %20 = math.rsqrt %19 : vector<1x4x1xf32>
    %c0_9 = arith.constant 0 : index
    %c0_10 = arith.constant 0 : index
    %21 = vector.load %arg2[%c0_9, %c0_10] : memref<4x1xf32, #tpu.memory_space<vmem>>, vector<4x1xf32>
    %22 = vector.shape_cast %21 : vector<4x1xf32> to vector<1x4x1xf32>
    %23 = arith.mulf %22, %20 : vector<1x4x1xf32>
    %c0_11 = arith.constant 0 : index
    %c0_12 = arith.constant 0 : index
    %24 = vector.load %arg3[%c0_11, %c0_12] : memref<4x1xf32, #tpu.memory_space<vmem>>, vector<4x1xf32>
    %25 = vector.shape_cast %24 : vector<4x1xf32> to vector<1x4x1xf32>
    %26 = arith.mulf %11, %23 : vector<1x4x1xf32>
    %27 = arith.subf %25, %26 : vector<1x4x1xf32>
    %28 = vector.broadcast %23 : vector<1x4x1xf32> to vector<2x4x256xf32>
    %29 = arith.mulf %0, %28 : vector<2x4x256xf32>
    %30 = vector.broadcast %27 : vector<1x4x1xf32> to vector<2x4x256xf32>
    %31 = arith.addf %29, %30 : vector<2x4x256xf32>
    %c0_13 = arith.constant 0 : index
    %c0_14 = arith.constant 0 : index
    %c0_15 = arith.constant 0 : index
    %32 = vector.load %arg4[%c0_13, %c0_14, %c0_15] : memref<2x4x256xf32, #tpu.memory_space<vmem>>, vector<2x4x256xf32>
    tpu.vector_store %arg4[%c0_13, %c0_14, %c0_15], %31 {strides = array<i32>} : memref<2x4x256xf32, #tpu.memory_space<vmem>>, vector<2x4x256xf32>,
    return
  }
  func.func @transform_0(%arg0: i32) -> (i32, i32, i32) {
    %c0_i32 = arith.constant 0 : i32
    %c0_i32_0 = arith.constant 0 : i32
    %c0_i32_1 = arith.constant 0 : i32
    return %c0_i32, %arg0, %c0_i32_0 : i32, i32, i32
  }
  func.func @transform_1(%arg0: i32) -> (i32, i32) {
    %c0_i32 = arith.constant 0 : i32
    %c0_i32_0 = arith.constant 0 : i32
    return %arg0, %c0_i32 : i32, i32
  }
  func.func @transform_2(%arg0: i32) -> (i32, i32) {
    %c0_i32 = arith.constant 0 : i32
    %c0_i32_0 = arith.constant 0 : i32
    return %arg0, %c0_i32 : i32, i32
  }
  func.func @transform_3(%arg0: i32) -> (i32, i32, i32) {
    %c0_i32 = arith.constant 0 : i32
    %c0_i32_0 = arith.constant 0 : i32
    %c0_i32_1 = arith.constant 0 : i32
    return %c0_i32, %arg0, %c0_i32_0 : i32, i32, i32
  }
}

</mosaic_0001>

<llo_original>
// kernel: tpu_custom_call.1
$region0: #{tpu_custom_call.1}
  #allocation0 [shape = 'u32[]', space=smem, size = 0x4, offset = 0x4, fixed_abs, tag = 'smem constant byte address 0x4 - core index']
  #allocation1 [shape = 'u32[144,128]{1,0:T(1,128)}', space=vmem, size = 0x12000, scoped, tag = 'internal scratch']
  %s0 = inlined_call_operand.hbm [shape: f32[2,4,256], index: 0, kind: input, shape index: {}]
  %s1 = inlined_call_operand.vmem [shape: f32[4,1], index: 1, kind: input, shape index: {}]
  %s2 = inlined_call_operand.vmem [shape: f32[4,1], index: 2, kind: input, shape index: {}]
  %s3 = inlined_call_operand.hbm [shape: f32[2,4,256], index: 3, kind: output, shape index: {}]
  %s4 = sld [smem:[#allocation0]]
  $region26: #{tpu_custom_call.1} parent=0
    _
  %s6 = ssub.s32 1, %s4
  %s7 = scalar_select 0, %s6, %s4
  $region1: #{tpu_custom_call.1} parent=0
    #allocation2 [shape = 'u8[8192]{0}', space=vmem, size = 0x2000, scoped, tag = 'input window, operand 0, single buffered']
    #allocation3 [shape = 's32[1]{0}', space=sflag, size = 0x4, scoped, tag = 'scoped memory for tpu_custom_call.1']
    #allocation4 [shape = 's32[1]{0}', space=sflag, size = 0x4, scoped, tag = 'scoped memory for tpu_custom_call.1']
    #allocation5 [shape = 'u8[8192]{0}', space=vmem, size = 0x2000, scoped, tag = 'output window, operand 0, single buffered']
    %8 = vsyncpa [#allocation3], 0
    %9 = vsyncpa [#allocation4], 0
    // Predicated region
    $region2: #{tpu_custom_call.1} parent=1 // pred_check
      _
    $region3: #{tpu_custom_call.1} parent=1 // pred_check_branch
      %11 = sbr.rel (0) target = $region5
    $region4: #{tpu_custom_call.1} parent=1 // pred_region
      %s13 = ssub.s32 256, 256
      %14 = vsyncadd [#allocation3], %s13
      %s15 = sshll.u32 [#allocation2], 4
      %s16 = int_to_ptr.vmem [resolvable:$true] %s15
      %21 = dma.hbm_to_vmem [thread:$0]  %s0, 256, %s16, [#allocation3], 128, 128, 8
    $region5: #{tpu_custom_call.1} parent=1 // pred_fallthru
      _
    // Predicated region
    $region6: #{tpu_custom_call.1} parent=1 // pred_check
      _
    $region7: #{tpu_custom_call.1} parent=1 // pred_check_branch
      %23 = sbr.rel (0) target = $region9
    $region8: #{tpu_custom_call.1} parent=1 // pred_region
      _
    $region9: #{tpu_custom_call.1} parent=1 // pred_fallthru
      _
    // Predicated region
    $region10: #{tpu_custom_call.1} parent=1 // pred_check
      _
    $region11: #{tpu_custom_call.1} parent=1 // pred_check_branch
      %25 = sbr.rel (0) target = $region13
    $region12: #{tpu_custom_call.1} parent=1 // pred_region
      _
    $region13: #{tpu_custom_call.1} parent=1 // pred_fallthru
      _
    // Predicated region
    $region14: #{tpu_custom_call.1} parent=1 // pred_check
      _
    $region15: #{tpu_custom_call.1} parent=1 // pred_check_branch
      %27 = sbr.rel (0) target = $region17
    $region16: #{tpu_custom_call.1} parent=1 // pred_region
      %28 = dma.done [#allocation3], 256
    $region17: #{tpu_custom_call.1} parent=1 // pred_fallthru
      _
    %v29 = vld [vmem:[#allocation2] sm:$0xff]
    %v30 = vld [vmem:[#allocation2 + $0x8] sm:$0xff]
    %v33 = vcombine.high %v29, %v29
    %v34 = vcombine.high %v30, %v30
    %vm37 = vcmask 1043456
    %v38 = vsel %vm37, %v29, 0.0
    %v39 = vsel %vm37, %v33, 0.0
    %v40 = vadd.f32 %v38, %v39
    %41 = vadd.xlane.f32.xlu0 %v40
    %v42 = vpop.xlane.xlu0 %41
    %v43 = vsel %vm37, %v30, 0.0
    %v44 = vsel %vm37, %v34, 0.0
    %v45 = vadd.f32 %v43, %v44
    %46 = vadd.xlane.f32.xlu0 %v45
    %v47 = vpop.xlane.xlu0 %46
    %v48 = vmul.f32 %v29, %v29
    %v49 = vmul.f32 %v30, %v30
    %v52 = vcombine.high %v48, %v48
    %v53 = vcombine.high %v49, %v49
    %v56 = vsel %vm37, %v48, 0.0
    %v57 = vsel %vm37, %v52, 0.0
    %v58 = vadd.f32 %v56, %v57
    %59 = vadd.xlane.f32.xlu0 %v58
    %v60 = vpop.xlane.xlu0 %59
    %v61 = vsel %vm37, %v49, 0.0
    %v62 = vsel %vm37, %v53, 0.0
    %v63 = vadd.f32 %v61, %v62
    %64 = vadd.xlane.f32.xlu0 %v63
    %v65 = vpop.xlane.xlu0 %64
    %v66 = vsel %vm37, %v42, 0.0
    %v67 = vsel %vm37, %v47, 0.0
    %v68 = vadd.f32 %v66, %v67
    %v69 = vsel %vm37, %v60, 0.0
    %v70 = vsel %vm37, %v65, 0.0
    %v71 = vadd.f32 %v69, %v70
    %v72 = vmul.f32 %v68, 0.001953125
    %v73 = vmul.f32 %v71, 0.001953125
    %v74 = vmul.f32 %v72, %v72
    %v75 = vsub.f32 %v73, %v74
    %v76 = vmax.f32 %v75, 0.0
    %v77 = vadd.f32 %v76, 1e-05
    %v78 = vrsqrt.pop %v77
    %v79 = vld [vmem:[%s1] sm:$0xf]
    %v80 = vmul.f32 %v79, %v78
    %v81 = vld [vmem:[%s2] sm:$0xf]
    %v82 = vmul.f32 %v72, %v80
    %v83 = vsub.f32 %v81, %v82
    %85 = vset.pattern.permute.xlu0 0
    %86 = vperm.xlu0 %85, %v80
    %v87 = vpop.permute.xlu0 %86
    %v89 = vunpack.c.l.s4 839922192
    %v90 = vunpack.c.0.s8 %v89
    %v91 = vlaneseq
    %v92 = vshrl.u32 %v91, 7
    %v93 = vsub.s32 %v90, %v92
    %v94 = vrot.slane %v87, %v93
    %v96 = vmul.f32 %v29, %v94
    %v97 = vmul.f32 %v30, %v94
    %99 = vset.pattern.permute.xlu0 0
    %100 = vperm.xlu0 %99, %v83
    %v101 = vpop.permute.xlu0 %100
    %v103 = vunpack.c.l.s4 839922192
    %v104 = vunpack.c.0.s8 %v103
    %v105 = vlaneseq
    %v106 = vshrl.u32 %v105, 7
    %v107 = vsub.s32 %v104, %v106
    %v108 = vrot.slane %v101, %v107
    %v110 = vadd.f32 %v96, %v108
    %v111 = vadd.f32 %v97, %v108
    %112 = vst [vmem:[#allocation5] sm:$0xff] %v110
    %113 = vst [vmem:[#allocation5 + $0x8] sm:$0xff] %v111
    // Predicated region
    $region18: #{tpu_custom_call.1} parent=1 // pred_check
      _
    $region19: #{tpu_custom_call.1} parent=1 // pred_check_branch
      %115 = sbr.rel (0) target = $region21
    $region20: #{tpu_custom_call.1} parent=1 // pred_region
      %s117 = ssub.s32 256, 256
      %118 = vsyncadd [#allocation4], %s117
      %s119 = sshll.u32 [#allocation5], 4
      %s120 = int_to_ptr.vmem [resolvable:$true] %s119
      %125 = dma.vmem_to_hbm [thread:$0]  %s120, 256, %s3, [#allocation4], 128, 128, 8
    $region21: #{tpu_custom_call.1} parent=1 // pred_fallthru
      _
    // Predicated region
    $region22: #{tpu_custom_call.1} parent=1 // pred_check
      _
    $region23: #{tpu_custom_call.1} parent=1 // pred_check_branch
      %127 = sbr.rel (0) target = $region25
    $region24: #{tpu_custom_call.1} parent=1 // pred_region
      %128 = dma.done [#allocation4], 256
    $region25: #{tpu_custom_call.1} parent=1 // pred_fallthru
      _
    %129 = vsyncpa [#allocation3], 1
    %130 = vsyncpa [#allocation4], 1

</llo_original>
